<compile_context>
chip_gen: v7x
topology: tpu7x:2x2x1
jax: 0.10.0
libtpu: 0.0.40
codegen_flags: <defaults>
</compile_context>

<pallas_src>
import functools
import math

import jax
import jax.numpy as jnp
from jax.experimental import pallas as pl
from jax.experimental.pallas import tpu as pltpu


# ---------------------------------------------------------------------------
# Kernel bodies
# ---------------------------------------------------------------------------

def _replicate_lanes(p, reps):
    # Lane-replicate a (TS, D) pos tile to (TS, reps*D).  Concatenation along
    # lanes is directly supported by Mosaic; reps is capped small (<=32) by the
    # tile planner.  XLU/copy work only -- free slack in a mem-bound kernel.
    if reps > 1:
        p = jnp.concatenate([p] * reps, axis=-1)
    return p


def _add2d_kernel(x_ref, pos_ref, o_ref, *, reps):
    # x_ref/o_ref: (TS, TL) over the flattened [S, B*D]; pos_ref: (TS, D).
    o_ref[...] = x_ref[...] + _replicate_lanes(pos_ref[...], reps)


def _add2d_dropout_kernel(x_ref, pos_ref, rnd_ref, o_ref, *, reps, keep_prob):
    y = x_ref[...] + _replicate_lanes(pos_ref[...], reps)
    keep = rnd_ref[...] < jnp.float32(keep_prob)
    scale = jnp.asarray(1.0 / keep_prob, dtype=y.dtype)
    o_ref[...] = jnp.where(keep, y * scale, jnp.zeros_like(y))


def _add3d_kernel(x_ref, pos_ref, o_ref):
    # x_ref/o_ref: (TS, TB, D); pos_ref: (TS, 1, D) -> implicit sublane broadcast.
    o_ref[...] = x_ref[...] + pos_ref[...]


def _add3d_dropout_kernel(x_ref, pos_ref, rnd_ref, o_ref, *, keep_prob):
    y = x_ref[...] + pos_ref[...]
    keep = rnd_ref[...] < jnp.float32(keep_prob)
    scale = jnp.asarray(1.0 / keep_prob, dtype=y.dtype)
    o_ref[...] = jnp.where(keep, y * scale, jnp.zeros_like(y))


# ---------------------------------------------------------------------------
# Tile planning
# ---------------------------------------------------------------------------

def _round_up(x, m):
    return ((x + m - 1) // m) * m


def _sublane_multiple(itemsize):
    # packed base tile: (8,128) f32, (16,128) bf16, (32,128) int8/fp8
    return max(8, 32 // itemsize)


def _plan_2d(S, L, D, itemsize, extra_bytes, target_bytes):
    """Tiles for the flattened [S, L=B*D] layout. Returns (ts, tl, reps)."""
    sub = _sublane_multiple(itemsize)
    per_elem = 2 * itemsize + extra_bytes          # x in + out (+ f32 mask)
    lane_unit = math.lcm(D, 128)                   # lane tile stays 128- and D-aligned
    unit_reps = lane_unit // D
    max_units = max(1, 32 // unit_reps)            # cap in-kernel replication width
    if lane_unit >= L:
        tl = L                                     # full lane extent (always legal)
    else:
        units = max(1, min(target_bytes // (sub * per_elem * lane_unit),
                           max_units, L // lane_unit))
        tl = units * lane_unit
    if S <= sub:
        ts = S
    else:
        ts = max(sub, (target_bytes // (tl * per_elem)) // sub * sub)
        ts = min(ts, (S // sub) * sub)
        if S >= 2 * sub:                           # megacore: >=2 leading-axis steps
            ts = min(ts, _round_up((S + 1) // 2, sub))
    return ts, tl, tl // D


def _plan_3d(S, B, D, itemsize, extra_bytes, target_bytes):
    """Tiles for the native [S, B, D] layout. Returns (ts, tb)."""
    sub = _sublane_multiple(itemsize)
    per_elem = 2 * itemsize + extra_bytes
    if B <= sub:
        tb = B
    else:
        tb = max(sub, (target_bytes // (D * per_elem)) // sub * sub)
        tb = min(tb, (B // sub) * sub)
    ts = max(1, target_bytes // (tb * D * per_elem))
    ts = min(ts, S)
    if S >= 2:                                     # megacore: >=2 leading-axis steps
        ts = min(ts, (S + 1) // 2)
    return ts, tb


# ---------------------------------------------------------------------------
# Wrapper
# ---------------------------------------------------------------------------

def positional_encoding_learned_1d(x, pos_embed_weight, *, dropout_p=0.1,
                                   training=False, seed=0,
                                   target_block_bytes=4 * 1024 * 1024,
                                   min_elements_for_kernel=8192,
                                   donate_x=False):
    """x: [S, B, D]; pos_embed_weight: [max_len, D] -> [S, B, D]."""
    S, B, D = x.shape
    N = S * B * D
    itemsize = int(jnp.dtype(x.dtype).itemsize)
    # Glue: arange(S) row gather + dtype cast hoisted out of the kernel.
    pos = pos_embed_weight[:S].astype(x.dtype)

    use_dropout = bool(training) and float(dropout_p) > 0.0
    if use_dropout and dropout_p >= 1.0:
        return jnp.zeros_like(x)
    keep_prob = 1.0 - float(dropout_p)

    # Portable dropout randomness (f32 keeps the keep-probability exact).
    # TODO(synk): cannot reproduce torch.nn.Dropout's RNG stream bit-for-bit.
    rnd = None
    if use_dropout:
        rnd = jax.random.uniform(jax.random.PRNGKey(seed), (S, B, D),
                                 dtype=jnp.float32)

    # Tiny inputs: launch / per-step overhead dominates; let XLA fuse.
    if N < min_elements_for_kernel:
        y = x + pos[:, None, :]
        if use_dropout:
            y = jnp.where(rnd < keep_prob,
                          y * jnp.asarray(1.0 / keep_prob, y.dtype),
                          jnp.zeros_like(y))
        return y.astype(x.dtype)

    extra = 4 if use_dropout else 0                # f32 mask bytes per element
    io_aliases = {0: 0} if donate_x else {}
    cost = pl.CostEstimate(
        flops=N * (3 if use_dropout else 1),
        transcendentals=0,
        bytes_accessed=2 * N * itemsize + S * D * itemsize + (4 * N if use_dropout else 0))

    # Path selection:
    #   D % 128 == 0                     -> native [S, B, D] (already lane-dense)
    #   small / 128-unaligned D (mult 8) -> flattened [S, B*D] lane-dense path
    #   otherwise / pathological D       -> native [S, B, D] (always legal)
    L = B * D
    lane_unit = math.lcm(D, 128)
    min_2d_block = (min(lane_unit, L) * _sublane_multiple(itemsize)
                    * (2 * itemsize + extra))
    use_2d = (D % 128 != 0) and (D % 8 == 0) and (
        min_2d_block <= max(2 * target_block_bytes, 8 * 1024 * 1024))

    if use_2d:
        ts, tl, reps = _plan_2d(S, L, D, itemsize, extra, target_block_bytes)
        grid = (pl.cdiv(S, ts), pl.cdiv(L, tl))
        block_bytes = ts * tl * (2 * itemsize + extra) + ts * D * itemsize
        vmem_limit = int(min(max(2 * block_bytes + (4 << 20), 32 << 20), 60 << 20))
        cparams = pltpu.CompilerParams(
            dimension_semantics=("parallel", "parallel"),
            vmem_limit_bytes=vmem_limit)
        x2 = x.reshape(S, L)
        x_spec = pl.BlockSpec((ts, tl), lambda s, l: (s, l))
        pos_spec = pl.BlockSpec((ts, D), lambda s, l: (s, 0))   # reused across lanes
        out_shape = jax.ShapeDtypeStruct((S, L), x.dtype)
        if not use_dropout:
            out = pl.pallas_call(
                functools.partial(_add2d_kernel, reps=reps),
                out_shape=out_shape,
                grid_spec=pltpu.PrefetchScalarGridSpec(
                    num_scalar_prefetch=0, grid=grid,
                    in_specs=[x_spec, pos_spec], out_specs=x_spec),
                compiler_params=cparams, cost_estimate=cost,
                input_output_aliases=io_aliases,
            )(x2, pos)
        else:
            rnd_spec = pl.BlockSpec((ts, tl), lambda s, l: (s, l))
            out = pl.pallas_call(
                functools.partial(_add2d_dropout_kernel, reps=reps,
                                  keep_prob=keep_prob),
                out_shape=out_shape,
                grid_spec=pltpu.PrefetchScalarGridSpec(
                    num_scalar_prefetch=0, grid=grid,
                    in_specs=[x_spec, pos_spec, rnd_spec], out_specs=x_spec),
                compiler_params=cparams, cost_estimate=cost,
                input_output_aliases=io_aliases,
            )(x2, pos, rnd.reshape(S, L))
        return out.reshape(S, B, D)

    # --- native [S, B, D] path --------------------------------------------
    ts, tb = _plan_3d(S, B, D, itemsize, extra, target_block_bytes)
    grid = (pl.cdiv(S, ts), pl.cdiv(B, tb))
    block_bytes = ts * tb * D * (2 * itemsize + extra) + ts * D * itemsize
    vmem_limit = int(min(max(2 * block_bytes + (4 << 20), 32 << 20), 60 << 20))
    cparams = pltpu.CompilerParams(
        dimension_semantics=("parallel", "parallel"),
        vmem_limit_bytes=vmem_limit)
    x_spec = pl.BlockSpec((ts, tb, D), lambda s, b: (s, b, 0))
    pos_spec = pl.BlockSpec((ts, 1, D), lambda s, b: (s, 0, 0))  # reused across batch
    out_shape = jax.ShapeDtypeStruct((S, B, D), x.dtype)
    pos3 = pos.reshape(S, 1, D)
    if not use_dropout:
        return pl.pallas_call(
            _add3d_kernel, out_shape=out_shape,
            grid_spec=pltpu.PrefetchScalarGridSpec(
                num_scalar_prefetch=0, grid=grid,
                in_specs=[x_spec, pos_spec], out_specs=x_spec),
            compiler_params=cparams, cost_estimate=cost,
            input_output_aliases=io_aliases,
        )(x, pos3)
    rnd_spec = pl.BlockSpec((ts, tb, D), lambda s, b: (s, b, 0))
    return pl.pallas_call(
        functools.partial(_add3d_dropout_kernel, keep_prob=keep_prob),
        out_shape=out_shape,
        grid_spec=pltpu.PrefetchScalarGridSpec(
            num_scalar_prefetch=0, grid=grid,
            in_specs=[x_spec, pos_spec, rnd_spec], out_specs=x_spec),
        compiler_params=cparams, cost_estimate=cost,
        input_output_aliases=io_aliases,
    )(x, pos3, rnd)


# ---------------------------------------------------------------------------
# Self-test
# ---------------------------------------------------------------------------

if __name__ == "__main__":
    key = jax.random.PRNGKey(0)
    k1, k2, k3, k4 = jax.random.split(key, 4)
    p = 0.1
    keep_prob = 1.0 - p

    # --- tiny shape consistent with the module (seq=8, batch=2, d_model=32) ---
    S, B, D = 8, 2, 32
    MAX_LEN = 64                       # stands in for max_len=5000 at small scale
    x = jax.random.normal(k1, (S, B, D), dtype=jnp.float32)
    w = jax.random.uniform(k2, (MAX_LEN, D), dtype=jnp.float32)   # nn.init.uniform_
    ref = x + w[:S][:, None, :]

    out = positional_encoding_learned_1d(x, w, training=False,
                                         min_elements_for_kernel=0)  # force kernel
    out = jax.block_until_ready(out)
    assert out.shape == (S, B, D)
    assert jnp.allclose(out, ref, atol=1e-6), "eval mismatch (2-D lane-dense path)"

    # dropout on the tiny shape (2-D path), exact check against host-side mask
    seed1 = 7
    out_d = positional_encoding_learned_1d(x, w, dropout_p=p, training=True,
                                           seed=seed1, min_elements_for_kernel=0)
    out_d = jax.block_until_ready(out_d)
    rnd1 = jax.random.uniform(jax.random.PRNGKey(seed1), (S, B, D), dtype=jnp.float32)
    exp_d = jnp.where(rnd1 < jnp.float32(keep_prob),
                      ref * jnp.asarray(1.0 / keep_prob, ref.dtype), 0.0)
    assert jnp.allclose(out_d, exp_d, atol=1e-5), "dropout mismatch (2-D path)"

    # --- larger shape exercising the native 3-D path with a multi-step grid ---
    S2, B2, D2 = 64, 8, 128
    MAX_LEN2 = 256
    x2 = jax.random.normal(k3, (S2, B2, D2), dtype=jnp.float32)
    w2 = jax.random.uniform(k4, (MAX_LEN2, D2), dtype=jnp.float32)
    ref2 = x2 + w2[:S2][:, None, :]

    out2 = positional_encoding_learned_1d(x2, w2, training=False,
                                          target_block_bytes=32 * 1024)
    out2 = jax.block_until_ready(out2)
    assert jnp.allclose(out2, ref2, atol=1e-6), "eval mismatch (3-D path)"

    seed2 = 123
    out3 = positional_encoding_learned_1d(x2, w2, dropout_p=p, training=True,
                                          seed=seed2, target_block_bytes=32 * 1024)
    out3 = jax.block_until_ready(out3)
    rnd2 = jax.random.uniform(jax.random.PRNGKey(seed2), (S2, B2, D2),
                              dtype=jnp.float32)
    exp3 = jnp.where(rnd2 < jnp.float32(keep_prob),
                     ref2 * jnp.asarray(1.0 / keep_prob, ref2.dtype), 0.0)
    assert jnp.allclose(out3, exp3, atol=1e-5), "dropout mismatch (3-D path)"
    drop_frac = float(jnp.mean((out3 == 0).astype(jnp.float32)))
    assert 0.02 < drop_frac < 0.30, f"dropout rate off: {drop_frac}"

    print("KERNEL_OK")
</pallas_src>

<mosaic_0001>
module attributes {stable_mosaic.version = 11 : i64} {
  func.func @_add2d_kernel(%arg0: i32, %arg1: i32, %arg2: memref<8x64xf32, #tpu.memory_space<vmem>>, %arg3: memref<8x32xf32, #tpu.memory_space<vmem>>, %arg4: memref<8x64xf32, #tpu.memory_space<vmem>>) attributes {dimension_semantics = [#tpu.dimension_semantics<parallel>, #tpu.dimension_semantics<parallel>], iteration_bounds = array<i64: 1, 1>, scalar_prefetch = 0 : i64, scratch_operands = 0 : i64, tpu.core_type = #tpu.core_type<tc>, window_params = [{transform_indices = @transform_0, window_bounds = array<i64: 8, 64>}, {transform_indices = @transform_1, window_bounds = array<i64: 8, 32>}, {transform_indices = @transform_2, window_bounds = array<i64: 8, 64>}]} {
    %c0 = arith.constant 0 : index
    %c0_0 = arith.constant 0 : index
    %0 = vector.load %arg2[%c0, %c0_0] : memref<8x64xf32, #tpu.memory_space<vmem>>, vector<8x64xf32>
    %c0_1 = arith.constant 0 : index
    %c0_2 = arith.constant 0 : index
    %1 = vector.load %arg3[%c0_1, %c0_2] : memref<8x32xf32, #tpu.memory_space<vmem>>, vector<8x32xf32>
    %2 = tpu.concatenate %1, %1 in 1 : vector<8x32xf32>, vector<8x32xf32> -> vector<8x64xf32>
    %3 = arith.addf %0, %2 : vector<8x64xf32>
    %c0_3 = arith.constant 0 : index
    %c0_4 = arith.constant 0 : index
    %4 = vector.load %arg4[%c0_3, %c0_4] : memref<8x64xf32, #tpu.memory_space<vmem>>, vector<8x64xf32>
    tpu.vector_store %arg4[%c0_3, %c0_4], %3 {strides = array<i32>} : memref<8x64xf32, #tpu.memory_space<vmem>>, vector<8x64xf32>,
    return
  }
  func.func @transform_0(%arg0: i32, %arg1: i32) -> (i32, i32) {
    %c0_i32 = arith.constant 0 : i32
    return %arg0, %arg1 : i32, i32
  }
  func.func @transform_1(%arg0: i32, %arg1: i32) -> (i32, i32) {
    %c0_i32 = arith.constant 0 : i32
    %c0_i32_0 = arith.constant 0 : i32
    return %arg0, %c0_i32 : i32, i32
  }
  func.func @transform_2(%arg0: i32, %arg1: i32) -> (i32, i32) {
    %c0_i32 = arith.constant 0 : i32
    return %arg0, %arg1 : i32, i32
  }
}

</mosaic_0001>

<llo_original>
// kernel: tpu_custom_call.1
$region0: #{tpu_custom_call.1}
  #allocation0 [shape = 'u32[]', space=smem, size = 0x4, offset = 0x4, fixed_abs, tag = 'smem constant byte address 0x4 - core index']
  #allocation1 [shape = 'u32[144,128]{1,0:T(1,128)}', space=vmem, size = 0x12000, scoped, tag = 'internal scratch']
  %s0 = inlined_call_operand.hbm [shape: f32[8,64], index: 0, kind: input, shape index: {}]
  %s1 = inlined_call_operand.hbm [shape: f32[8,32], index: 1, kind: input, shape index: {}]
  %s2 = inlined_call_operand.hbm [shape: f32[8,64], index: 2, kind: output, shape index: {}]
  %s3 = sld [smem:[#allocation0]]
  $region26: #{tpu_custom_call.1} parent=0
    _
  %s5 = ssub.s32 1, %s3
  %s6 = scalar_select 0, %s5, %s3
  $region1: #{tpu_custom_call.1} parent=0
    #allocation2 [shape = 'u8[4096]{0}', space=vmem, size = 0x1000, scoped, tag = 'input window, operand 0, single buffered']
    #allocation3 [shape = 's32[1]{0}', space=sflag, size = 0x4, scoped, tag = 'scoped memory for tpu_custom_call.1']
    #allocation4 [shape = 's32[1]{0}', space=sflag, size = 0x4, scoped, tag = 'scoped memory for tpu_custom_call.1']
    #allocation5 [shape = 'u8[4096]{0}', space=vmem, size = 0x1000, scoped, tag = 'input window, operand 1, single buffered']
    #allocation6 [shape = 's32[1]{0}', space=sflag, size = 0x4, scoped, tag = 'scoped memory for tpu_custom_call.1']
    #allocation7 [shape = 'u8[4096]{0}', space=vmem, size = 0x1000, scoped, tag = 'output window, operand 0, single buffered']
    %7 = vsyncpa [#allocation3], 0
    %8 = vsyncpa [#allocation6], 0
    %9 = vsyncpa [#allocation4], 0
    // Predicated region
    $region2: #{tpu_custom_call.1} parent=1 // pred_check
      _
    $region3: #{tpu_custom_call.1} parent=1 // pred_check_branch
      %11 = sbr.rel (0) target = $region5
    $region4: #{tpu_custom_call.1} parent=1 // pred_region
      %s13 = ssub.s32 128, 128
      %14 = vsyncadd [#allocation3], %s13
      %s16 = sshll.u32 [#allocation2], 4
      %s17 = int_to_ptr.vmem [resolvable:$true] %s16
      %19 = dma.hbm_to_vmem [thread:$0]  %s0, 128, %s17, [#allocation3]
    $region5: #{tpu_custom_call.1} parent=1 // pred_fallthru
      _
    // Predicated region
    $region6: #{tpu_custom_call.1} parent=1 // pred_check
      _
    $region7: #{tpu_custom_call.1} parent=1 // pred_check_branch
      %21 = sbr.rel (0) target = $region9
    $region8: #{tpu_custom_call.1} parent=1 // pred_region
      %s23 = ssub.s32 128, 128
      %24 = vsyncadd [#allocation6], %s23
      %s26 = sshll.u32 [#allocation5], 4
      %s27 = int_to_ptr.vmem [resolvable:$true] %s26
      %29 = dma.hbm_to_vmem [thread:$0]  %s1, 128, %s27, [#allocation6]
    $region9: #{tpu_custom_call.1} parent=1 // pred_fallthru
      _
    // Predicated region
    $region10: #{tpu_custom_call.1} parent=1 // pred_check
      _
    $region11: #{tpu_custom_call.1} parent=1 // pred_check_branch
      %31 = sbr.rel (0) target = $region13
    $region12: #{tpu_custom_call.1} parent=1 // pred_region
      %32 = dma.done [#allocation3], 128
    $region13: #{tpu_custom_call.1} parent=1 // pred_fallthru
      _
    // Predicated region
    $region14: #{tpu_custom_call.1} parent=1 // pred_check
      _
    $region15: #{tpu_custom_call.1} parent=1 // pred_check_branch
      %34 = sbr.rel (0) target = $region17
    $region16: #{tpu_custom_call.1} parent=1 // pred_region
      %35 = dma.done [#allocation6], 128
    $region17: #{tpu_custom_call.1} parent=1 // pred_fallthru
      _
    %v36 = vld [vmem:[#allocation2] sm:$0xff]
    %v37 = vld [vmem:[#allocation5] sm:$0xff]
    %39 = vrot.lane.b32.xlu0 %v37, 32
    %v40 = vpop.permute.xlu0 %39
    %vm42 = vcmask 261120
    %v43 = vsel %vm42, %v37, %v40
    %v44 = vadd.f32 %v36, %v43
    %vm45 = vcmask 523264
    %46 = vst.msk [vmem:[#allocation7] sm:$0xff] %vm45, %v44
    // Predicated region
    $region18: #{tpu_custom_call.1} parent=1 // pred_check
      _
    $region19: #{tpu_custom_call.1} parent=1 // pred_check_branch
      %48 = sbr.rel (0) target = $region21
    $region20: #{tpu_custom_call.1} parent=1 // pred_region
      %s50 = ssub.s32 128, 128
      %51 = vsyncadd [#allocation4], %s50
      %s53 = sshll.u32 [#allocation7], 4
      %s54 = int_to_ptr.vmem [resolvable:$true] %s53
      %56 = dma.vmem_to_hbm [thread:$0]  %s54, 128, %s2, [#allocation4]
    $region21: #{tpu_custom_call.1} parent=1 // pred_fallthru
      _
    // Predicated region
    $region22: #{tpu_custom_call.1} parent=1 // pred_check
      _
    $region23: #{tpu_custom_call.1} parent=1 // pred_check_branch
      %58 = sbr.rel (0) target = $region25
    $region24: #{tpu_custom_call.1} parent=1 // pred_region
      %59 = dma.done [#allocation4], 128
    $region25: #{tpu_custom_call.1} parent=1 // pred_fallthru
      _
    %60 = vsyncpa [#allocation3], 1
    %61 = vsyncpa [#allocation6], 1
    %62 = vsyncpa [#allocation4], 1

</llo_original>
